<compile_context>
chip_gen: v5e
topology: v5e:2x2
jax: 0.10.0
libtpu: 0.0.40
codegen_flags: <defaults>
</compile_context>

<pallas_src>
import functools

import jax
import jax.numpy as jnp
from jax import lax
from jax.experimental import pallas as pl
from jax.experimental.pallas import tpu as pltpu

LANE = 128


# ------------------------------ small helpers --------------------------------
def _round_up(n, m):
    return ((n + m - 1) // m) * m


def _cdiv(a, b):
    return -(-a // b)


def _pad_to(a, shape):
    return jnp.pad(a, [(0, t - s) for s, t in zip(a.shape, shape)])


def _chip_vmem_bytes():
    """Per-TensorCore VMEM capacity; conservative (v7x, 64 MiB) fallback."""
    try:
        return int(pltpu.get_tpu_info().vmem_capacity_bytes)
    except Exception:
        return 64 << 20


def _use_bf16_activations():
    """bf16 tanh on v6e / v7x (EUP supports bf16 there); f32 tanh on <= v5."""
    try:
        kind = jax.devices()[0].device_kind.lower()
    except Exception:
        return False
    return not any(v in kind for v in ("v2", "v3", "v4", "v5"))


def _weight_spec(shape, single_buffer):
    """BlockSpec for a constant-index (VMEM-resident) operand."""
    ndim = len(shape)
    index_map = lambda *_: (0,) * ndim
    if single_buffer:
        # Fetched once -> a single buffer halves the resident footprint.
        return pl.BlockSpec(shape, index_map, pipeline_mode=pl.Buffered(1))
    return pl.BlockSpec(shape, index_map)


# ----------------------------- Pallas kernels --------------------------------
def _make_resident_kernel(n_hidden, act_dtype):
    """All weights VMEM-resident; bf16 MXU operands, f32 accumulation."""

    def _layer(h, w, b):
        pre = jnp.dot(h.astype(jnp.bfloat16), w,
                      preferred_element_type=jnp.float32) + b
        return jnp.tanh(pre.astype(act_dtype))

    if n_hidden > 0:
        def kernel(x_ref, w_in_ref, b_in_ref, w_hid_ref, b_hid_ref,
                   w_out_ref, b_out_ref, o_ref):
            h = _layer(x_ref[...], w_in_ref[...], b_in_ref[...])
            if n_hidden <= 4:
                # Small depth: static unroll is cheapest.
                for k in range(n_hidden):
                    h = _layer(h, w_hid_ref[k], b_hid_ref[k])
            else:
                # Deep stacks: fori_loop bounds live ranges / code size.
                h = lax.fori_loop(
                    0, n_hidden,
                    lambda k, hh: _layer(hh, w_hid_ref[k], b_hid_ref[k]), h)
            o_ref[...] = (jnp.dot(h.astype(jnp.bfloat16), w_out_ref[...],
                                  preferred_element_type=jnp.float32)
                          + b_out_ref[...]).astype(o_ref.dtype)
        return kernel

    def kernel_no_hidden(x_ref, w_in_ref, b_in_ref, w_out_ref, b_out_ref,
                         o_ref):
        h = _layer(x_ref[...], w_in_ref[...], b_in_ref[...])
        o_ref[...] = (jnp.dot(h.astype(jnp.bfloat16), w_out_ref[...],
                              preferred_element_type=jnp.float32)
                      + b_out_ref[...]).astype(o_ref.dtype)
    return kernel_no_hidden


def _make_streamed_kernel(act_dtype):
    """Hidden-layer weights streamed over grid axis 1; h carried in scratch."""

    def kernel(x_ref, w_in_ref, b_in_ref, w_hid_ref, b_hid_ref,
               w_out_ref, b_out_ref, o_ref, h_ref):
        l = pl.program_id(1)

        @pl.when(l == 0)
        def _():
            pre = jnp.dot(x_ref[...].astype(jnp.bfloat16), w_in_ref[...],
                          preferred_element_type=jnp.float32) + b_in_ref[...]
            h_ref[...] = jnp.tanh(pre.astype(act_dtype))

        pre = jnp.dot(h_ref[...].astype(jnp.bfloat16), w_hid_ref[0],
                      preferred_element_type=jnp.float32) + b_hid_ref[0]
        h = jnp.tanh(pre.astype(act_dtype))
        h_ref[...] = h

        @pl.when(l == pl.num_programs(1) - 1)
        def _():
            o_ref[...] = (jnp.dot(h.astype(jnp.bfloat16), w_out_ref[...],
                                  preferred_element_type=jnp.float32)
                          + b_out_ref[...]).astype(o_ref.dtype)
    return kernel


# ------------------------- One-time parameter prep ----------------------------
def prepare_device_params(params):
    """Transpose to (in, out), pad only the 128-lane output dims, cast to bf16.

    Run ONCE outside the hot path.  The contraction dim of the first layer
    (input_dim) is intentionally NOT padded, so the forward pass never pads x.
    Padding is mathematically inert: padded biases = 0 -> tanh(0) = 0 and
    padded weight rows/cols = 0.
    """
    w_in, b_in, w_hid, b_hid, w_out, b_out = params
    neurons, input_dim = w_in.shape
    output_dim = w_out.shape[0]
    L = w_hid.shape[0]

    Np = _round_up(max(neurons, 1), LANE)
    Op = _round_up(max(output_dim, 1), LANE)

    w_in_p = _pad_to(w_in.T.astype(jnp.float32), (input_dim, Np)).astype(jnp.bfloat16)
    b_in_p = _pad_to(b_in.astype(jnp.float32)[None, :], (1, Np))
    if L > 0:
        w_hid_p = _pad_to(jnp.transpose(w_hid, (0, 2, 1)).astype(jnp.float32),
                          (L, Np, Np)).astype(jnp.bfloat16)
        b_hid_p = _pad_to(b_hid.astype(jnp.float32)[:, None, :], (L, 1, Np))
    else:
        w_hid_p = jnp.zeros((0, Np, Np), jnp.bfloat16)
        b_hid_p = jnp.zeros((0, 1, Np), jnp.float32)
    w_out_p = _pad_to(w_out.T.astype(jnp.float32), (Np, Op)).astype(jnp.bfloat16)
    b_out_p = _pad_to(b_out.astype(jnp.float32)[None, :], (1, Op))
    return jax.device_put((w_in_p, b_in_p, w_hid_p, b_hid_p, w_out_p, b_out_p))


# ------------------------------ Forward ---------------------------------------
@functools.partial(jax.jit, static_argnames=("output_dim", "use_bf16_act",
                                              "force_stream",
                                              "single_buffer_weights"))
def _forward_jit(x, dev_params, *, output_dim, use_bf16_act, force_stream,
                 single_buffer_weights):
    w_in_p, b_in_p, w_hid_p, b_hid_p, w_out_p, b_out_p = dev_params
    D, Np = w_in_p.shape
    Op = w_out_p.shape[1]
    L = w_hid_p.shape[0]
    act_dtype = jnp.bfloat16 if use_bf16_act else jnp.float32

    B = x.shape[0]
    # Batch tile: multiple of 16, capped at 512 rows, and >= 2 grid steps for
    # medium/large batches so both v7x TensorCores get work on the "parallel"
    # batch axis.  Tiny batches (< one tile) get a one-off pad; everything
    # else uses a cdiv grid with a (masked) partial last block -- rows never
    # mix and out-of-range rows are never stored, so this is safe.
    TB = max(16, min(512, _round_up(_cdiv(B, 2), 16)))
    TB = min(TB, _round_up(B, 8))
    x = x.astype(jnp.float32)
    B_eff = max(B, TB)
    if B_eff != B:
        x = jnp.pad(x, ((0, B_eff - B), (0, 0)))
    nb = _cdiv(B_eff, TB)

    # Generation-aware VMEM budget (v7x has 64 MiB per TensorCore).
    chip_vmem = _chip_vmem_bytes()
    vmem_cap = min(max(16 << 20, chip_vmem - (8 << 20)), 100 << 20)

    weight_bytes_once = ((D * Np + L * Np * Np + Np * Op) * 2
                         + ((L + 1) * Np + Op) * 4)
    io_tile_bytes = TB * D * 4 + TB * Op * 2      # f32 x tile, bf16 out tile
    stream_layers = (L > 0) and (
        force_stream
        or weight_bytes_once + 2 * io_tile_bytes > int(0.4 * chip_vmem))

    flops = 2 * B_eff * (D * Np + L * Np * Np + Np * Op)
    transcendentals = B_eff * Np * (L + 1)
    bytes_accessed = B_eff * D * 4 + B_eff * Op * 2 + weight_bytes_once
    cost = pl.CostEstimate(flops=flops, transcendentals=transcendentals,
                           bytes_accessed=bytes_accessed)

    x_spec = pl.BlockSpec((TB, D), lambda i, *_: (i, 0))
    out_spec = pl.BlockSpec((TB, Op), lambda i, *_: (i, 0))
    out_shape = jax.ShapeDtypeStruct((B_eff, Op), jnp.bfloat16)

    if not stream_layers:
        # All weights VMEM-resident across grid steps (constant block index).
        in_specs = [x_spec,
                    _weight_spec((D, Np), single_buffer_weights),
                    _weight_spec((1, Np), single_buffer_weights)]
        operands = [x, w_in_p, b_in_p]
        if L > 0:
            in_specs += [_weight_spec((L, Np, Np), single_buffer_weights),
                         _weight_spec((L, 1, Np), single_buffer_weights)]
            operands += [w_hid_p, b_hid_p]
        in_specs += [_weight_spec((Np, Op), single_buffer_weights),
                     _weight_spec((1, Op), single_buffer_weights)]
        operands += [w_out_p, b_out_p]

        vmem_limit = min(vmem_cap,
                         int(weight_bytes_once + 4 * io_tile_bytes + (8 << 20)))
        out = pl.pallas_call(
            _make_resident_kernel(L, act_dtype),
            out_shape=out_shape,
            grid=(nb,),
            in_specs=in_specs,
            out_specs=out_spec,
            compiler_params=pltpu.CompilerParams(
                dimension_semantics=("parallel",),
                vmem_limit_bytes=vmem_limit),
            cost_estimate=cost,
        )(*operands)
    else:
        # Stream one hidden layer per grid step; activation lives in scratch.
        in_specs = [
            x_spec,
            _weight_spec((D, Np), single_buffer_weights),
            _weight_spec((1, Np), single_buffer_weights),
            pl.BlockSpec((1, Np, Np), lambda i, l: (l, 0, 0)),
            pl.BlockSpec((1, 1, Np), lambda i, l: (l, 0, 0)),
            _weight_spec((Np, Op), single_buffer_weights),
            _weight_spec((1, Op), single_buffer_weights),
        ]
        hid_stream_bytes = 2 * (Np * Np * 2 + Np * 4)       # double-buffered layer
        other_w_bytes = (D * Np + Np * Op) * 2 + (Np + Op) * 4
        h_scratch_bytes = TB * Np * (2 if use_bf16_act else 4)
        vmem_limit = min(vmem_cap,
                         int(other_w_bytes + hid_stream_bytes + h_scratch_bytes
                             + 4 * io_tile_bytes + (8 << 20)))
        out = pl.pallas_call(
            _make_streamed_kernel(act_dtype),
            out_shape=out_shape,
            grid=(nb, L),
            in_specs=in_specs,
            out_specs=out_spec,
            scratch_shapes=[pltpu.VMEM((TB, Np), act_dtype)],
            compiler_params=pltpu.CompilerParams(
                dimension_semantics=("parallel", "arbitrary"),
                vmem_limit_bytes=vmem_limit),
            cost_estimate=cost,
        )(x, w_in_p, b_in_p, w_hid_p, b_hid_p, w_out_p, b_out_p)

    return out[:B, :output_dim].astype(jnp.float32)


_WEIGHT_SINGLE_BUFFER = None   # resolved on first forward call


def neuralnet_forward(x, dev_params, *, output_dim, force_stream=False):
    """MLP forward in a single fused Pallas kernel (batch-gridded)."""
    global _WEIGHT_SINGLE_BUFFER
    use_bf16 = _use_bf16_activations()
    if _WEIGHT_SINGLE_BUFFER is None:
        try:
            out = _forward_jit(x, dev_params, output_dim=output_dim,
                               use_bf16_act=use_bf16, force_stream=force_stream,
                               single_buffer_weights=True)
            out = jax.block_until_ready(out)
            _WEIGHT_SINGLE_BUFFER = True
            return out
        except Exception:
            # pipeline_mode=pl.Buffered(1) unsupported in this JAX/Mosaic
            # build: fall back to default (double-buffered) weight blocks.
            _WEIGHT_SINGLE_BUFFER = False
    return _forward_jit(x, dev_params, output_dim=output_dim,
                        use_bf16_act=use_bf16, force_stream=force_stream,
                        single_buffer_weights=_WEIGHT_SINGLE_BUFFER)


# --------------------------- Parameter init ----------------------------------
def init_params(key, input_dim, output_dim, n_hidden_layers, neurons):
    """Xavier-uniform init with tanh gain (5/3), bias = 0.01 (matches init_xavier)."""
    gain = 5.0 / 3.0

    def xavier(k, fan_in, fan_out):
        bound = gain * jnp.sqrt(6.0 / (fan_in + fan_out))
        # PyTorch Linear weight layout: (out_features, in_features)
        return jax.random.uniform(k, (fan_out, fan_in), jnp.float32, -bound, bound)

    keys = jax.random.split(key, n_hidden_layers + 1)
    w_in = xavier(keys[0], input_dim, neurons)
    b_in = jnp.full((neurons,), 0.01, jnp.float32)

    n_hid = n_hidden_layers - 1
    if n_hid > 0:
        w_hid = jnp.stack([xavier(keys[1 + i], neurons, neurons) for i in range(n_hid)])
    else:
        w_hid = jnp.zeros((0, neurons, neurons), jnp.float32)
    b_hid = jnp.full((max(n_hid, 0), neurons), 0.01, jnp.float32)

    w_out = xavier(keys[-1], neurons, output_dim)
    b_out = jnp.full((output_dim,), 0.01, jnp.float32)
    return (w_in, b_in, w_hid, b_hid, w_out, b_out)


def reference_forward(x, params):
    w_in, b_in, w_hid, b_hid, w_out, b_out = params
    h = jnp.tanh(x @ w_in.T + b_in)
    for k in range(w_hid.shape[0]):
        h = jnp.tanh(h @ w_hid[k].T + b_hid[k])
    return h @ w_out.T + b_out


# TODO(synk): regularization() is a training-time L_p weight-norm penalty, not
# part of the forward pass; it is intentionally not implemented as a kernel.

# ------------------------------- Main -----------------------------------------
if __name__ == "__main__":
    input_dim, output_dim = 2, 1
    n_hidden_layers, neurons = 3, 32
    batch = 8

    key = jax.random.PRNGKey(0)
    k_param, k_x, k_x2 = jax.random.split(key, 3)
    params = init_params(k_param, input_dim, output_dim, n_hidden_layers, neurons)
    dev_params = prepare_device_params(params)   # one-time prep, off hot path

    tol = dict(atol=5e-2, rtol=5e-2)   # bf16 MXU operands / bf16 output store

    # 1) Base case: small batch, weights VMEM-resident.
    x = jax.random.normal(k_x, (batch, input_dim), jnp.float32)
    out = jax.block_until_ready(
        neuralnet_forward(x, dev_params, output_dim=output_dim))
    ref = reference_forward(x, params)
    assert out.shape == (batch, output_dim)
    assert jnp.allclose(out, ref, **tol), "mismatch vs reference (resident)"

    # 2) Larger, non-tile-aligned batch: cdiv grid with a partial last block.
    x2 = jax.random.normal(k_x2, (100, input_dim), jnp.float32)
    out2 = jax.block_until_ready(
        neuralnet_forward(x2, dev_params, output_dim=output_dim))
    ref2 = reference_forward(x2, params)
    assert out2.shape == (100, output_dim)
    assert jnp.allclose(out2, ref2, **tol), "mismatch vs reference (cdiv grid)"

    # 3) Layer-streaming variant (auto-selected when resident weights would
    #    not fit the VMEM budget, e.g. large neurons/depth on v7x); forced
    #    here to validate that code path.
    out3 = jax.block_until_ready(
        neuralnet_forward(x, dev_params, output_dim=output_dim, force_stream=True))
    assert jnp.allclose(out3, ref, **tol), "mismatch vs reference (streamed)"

    # 4) n_hidden_layers == 1 (no hidden stack) variant.
    params1 = init_params(k_param, input_dim, output_dim, 1, neurons)
    dev_params1 = prepare_device_params(params1)
    out4 = jax.block_until_ready(
        neuralnet_forward(x, dev_params1, output_dim=output_dim))
    ref4 = reference_forward(x, params1)
    assert jnp.allclose(out4, ref4, **tol), "mismatch vs reference (no hidden)"

    print("KERNEL_OK")
</pallas_src>

<mosaic_0001>
module attributes {stable_mosaic.version = 11 : i64} {
  func.func @kernel(%arg0: i32, %arg1: memref<8x2xf32, #tpu.memory_space<vmem>>, %arg2: memref<2x128xbf16, #tpu.memory_space<vmem>>, %arg3: memref<1x128xf32, #tpu.memory_space<vmem>>, %arg4: memref<2x128x128xbf16, #tpu.memory_space<vmem>>, %arg5: memref<2x1x128xf32, #tpu.memory_space<vmem>>, %arg6: memref<128x128xbf16, #tpu.memory_space<vmem>>, %arg7: memref<1x128xf32, #tpu.memory_space<vmem>>, %arg8: memref<8x128xbf16, #tpu.memory_space<vmem>>) attributes {dimension_semantics = [#tpu.dimension_semantics<parallel>], iteration_bounds = array<i64: 1>, scalar_prefetch = 0 : i64, scratch_operands = 0 : i64, tpu.core_type = #tpu.core_type<tc>, window_params = [{transform_indices = @transform_0, window_bounds = array<i64: 8, 2>}, {pipeline_mode = #tpu.pipeline_mode<synchronous>, transform_indices = @transform_1, window_bounds = array<i64: 2, 128>}, {pipeline_mode = #tpu.pipeline_mode<synchronous>, transform_indices = @transform_2, window_bounds = array<i64: 1, 128>}, {pipeline_mode = #tpu.pipeline_mode<synchronous>, transform_indices = @transform_3, window_bounds = array<i64: 2, 128, 128>}, {pipeline_mode = #tpu.pipeline_mode<synchronous>, transform_indices = @transform_4, window_bounds = array<i64: 2, 1, 128>}, {pipeline_mode = #tpu.pipeline_mode<synchronous>, transform_indices = @transform_5, window_bounds = array<i64: 128, 128>}, {pipeline_mode = #tpu.pipeline_mode<synchronous>, transform_indices = @transform_6, window_bounds = array<i64: 1, 128>}, {transform_indices = @transform_7, window_bounds = array<i64: 8, 128>}]} {
    %c0 = arith.constant 0 : index
    %c0_0 = arith.constant 0 : index
    %0 = vector.load %arg1[%c0, %c0_0] : memref<8x2xf32, #tpu.memory_space<vmem>>, vector<8x2xf32>
    %c0_1 = arith.constant 0 : index
    %c0_2 = arith.constant 0 : index
    %1 = vector.load %arg2[%c0_1, %c0_2] : memref<2x128xbf16, #tpu.memory_space<vmem>>, vector<2x128xbf16>
    %c0_3 = arith.constant 0 : index
    %c0_4 = arith.constant 0 : index
    %2 = vector.load %arg3[%c0_3, %c0_4] : memref<1x128xf32, #tpu.memory_space<vmem>>, vector<1x128xf32>
    %3 = arith.truncf %0 : vector<8x2xf32> to vector<8x2xbf16>
    %cst = arith.constant dense<0.000000e+00> : vector<8x128xf32>
    %4 = tpu.matmul %3, %1, %cst {dimension_numbers = #tpu.dot_dimension_numbers<[1], [0], [0], [1], [0, 0, 1, 1], [], []>} : vector<8x2xbf16>, vector<2x128xbf16>, vector<8x128xf32> -> vector<8x128xf32>
    %5 = vector.broadcast %2 : vector<1x128xf32> to vector<8x128xf32>
    %6 = arith.addf %4, %5 : vector<8x128xf32>
    %7 = arith.truncf %6 : vector<8x128xf32> to vector<8x128xbf16>
    %8 = math.tanh %7 : vector<8x128xbf16>
    %c0_5 = arith.constant 0 : index
    %c0_6 = arith.constant 0 : index
    %c0_7 = arith.constant 0 : index
    %9 = vector.load %arg4[%c0_5, %c0_6, %c0_7] : memref<2x128x128xbf16, #tpu.memory_space<vmem>>, vector<1x128x128xbf16>
    %10 = vector.shape_cast %9 : vector<1x128x128xbf16> to vector<128x128xbf16>
    %c0_8 = arith.constant 0 : index
    %c0_9 = arith.constant 0 : index
    %c0_10 = arith.constant 0 : index
    %11 = vector.load %arg5[%c0_8, %c0_9, %c0_10] : memref<2x1x128xf32, #tpu.memory_space<vmem>>, vector<1x1x128xf32>
    %12 = vector.shape_cast %11 : vector<1x1x128xf32> to vector<1x128xf32>
    %cst_11 = arith.constant dense<0.000000e+00> : vector<8x128xf32>
    %13 = tpu.matmul %8, %10, %cst_11 {dimension_numbers = #tpu.dot_dimension_numbers<[1], [0], [0], [1], [0, 0, 1, 1], [], []>} : vector<8x128xbf16>, vector<128x128xbf16>, vector<8x128xf32> -> vector<8x128xf32>
    %14 = vector.broadcast %12 : vector<1x128xf32> to vector<8x128xf32>
    %15 = arith.addf %13, %14 : vector<8x128xf32>
    %16 = arith.truncf %15 : vector<8x128xf32> to vector<8x128xbf16>
    %17 = math.tanh %16 : vector<8x128xbf16>
    %c1 = arith.constant 1 : index
    %c0_12 = arith.constant 0 : index
    %c0_13 = arith.constant 0 : index
    %18 = vector.load %arg4[%c1, %c0_12, %c0_13] : memref<2x128x128xbf16, #tpu.memory_space<vmem>>, vector<1x128x128xbf16>
    %19 = vector.shape_cast %18 : vector<1x128x128xbf16> to vector<128x128xbf16>
    %c1_14 = arith.constant 1 : index
    %c0_15 = arith.constant 0 : index
    %c0_16 = arith.constant 0 : index
    %20 = vector.load %arg5[%c1_14, %c0_15, %c0_16] : memref<2x1x128xf32, #tpu.memory_space<vmem>>, vector<1x1x128xf32>
    %21 = vector.shape_cast %20 : vector<1x1x128xf32> to vector<1x128xf32>
    %cst_17 = arith.constant dense<0.000000e+00> : vector<8x128xf32>
    %22 = tpu.matmul %17, %19, %cst_17 {dimension_numbers = #tpu.dot_dimension_numbers<[1], [0], [0], [1], [0, 0, 1, 1], [], []>} : vector<8x128xbf16>, vector<128x128xbf16>, vector<8x128xf32> -> vector<8x128xf32>
    %23 = vector.broadcast %21 : vector<1x128xf32> to vector<8x128xf32>
    %24 = arith.addf %22, %23 : vector<8x128xf32>
    %25 = arith.truncf %24 : vector<8x128xf32> to vector<8x128xbf16>
    %26 = math.tanh %25 : vector<8x128xbf16>
    %c0_18 = arith.constant 0 : index
    %c0_19 = arith.constant 0 : index
    %27 = vector.load %arg6[%c0_18, %c0_19] : memref<128x128xbf16, #tpu.memory_space<vmem>>, vector<128x128xbf16>
    %cst_20 = arith.constant dense<0.000000e+00> : vector<8x128xf32>
    %28 = tpu.matmul %26, %27, %cst_20 {dimension_numbers = #tpu.dot_dimension_numbers<[1], [0], [0], [1], [0, 0, 1, 1], [], []>} : vector<8x128xbf16>, vector<128x128xbf16>, vector<8x128xf32> -> vector<8x128xf32>
    %c0_21 = arith.constant 0 : index
    %c0_22 = arith.constant 0 : index
    %29 = vector.load %arg7[%c0_21, %c0_22] : memref<1x128xf32, #tpu.memory_space<vmem>>, vector<1x128xf32>
    %30 = vector.broadcast %29 : vector<1x128xf32> to vector<8x128xf32>
    %31 = arith.addf %28, %30 : vector<8x128xf32>
    %32 = arith.truncf %31 : vector<8x128xf32> to vector<8x128xbf16>
    %c0_23 = arith.constant 0 : index
    %c0_24 = arith.constant 0 : index
    %33 = vector.load %arg8[%c0_23, %c0_24] : memref<8x128xbf16, #tpu.memory_space<vmem>>, vector<8x128xbf16>
    tpu.vector_store %arg8[%c0_23, %c0_24], %32 {strides = array<i32>} : memref<8x128xbf16, #tpu.memory_space<vmem>>, vector<8x128xbf16>,
    return
  }
  func.func @transform_0(%arg0: i32) -> (i32, i32) {
    %c0_i32 = arith.constant 0 : i32
    %c0_i32_0 = arith.constant 0 : i32
    return %arg0, %c0_i32 : i32, i32
  }
  func.func @transform_1(%arg0: i32) -> (i32, i32) {
    %c0_i32 = arith.constant 0 : i32
    %c0_i32_0 = arith.constant 0 : i32
    %c0_i32_1 = arith.constant 0 : i32
    return %c0_i32, %c0_i32_0 : i32, i32
  }
  func.func @transform_2(%arg0: i32) -> (i32, i32) {
    %c0_i32 = arith.constant 0 : i32
    %c0_i32_0 = arith.constant 0 : i32
    %c0_i32_1 = arith.constant 0 : i32
    return %c0_i32, %c0_i32_0 : i32, i32
  }
  func.func @transform_3(%arg0: i32) -> (i32, i32, i32) {
    %c0_i32 = arith.constant 0 : i32
    %c0_i32_0 = arith.constant 0 : i32
    %c0_i32_1 = arith.constant 0 : i32
    %c0_i32_2 = arith.constant 0 : i32
    return %c0_i32, %c0_i32_0, %c0_i32_1 : i32, i32, i32
  }
  func.func @transform_4(%arg0: i32) -> (i32, i32, i32) {
    %c0_i32 = arith.constant 0 : i32
    %c0_i32_0 = arith.constant 0 : i32
    %c0_i32_1 = arith.constant 0 : i32
    %c0_i32_2 = arith.constant 0 : i32
    return %c0_i32, %c0_i32_0, %c0_i32_1 : i32, i32, i32
  }
  func.func @transform_5(%arg0: i32) -> (i32, i32) {
    %c0_i32 = arith.constant 0 : i32
    %c0_i32_0 = arith.constant 0 : i32
    %c0_i32_1 = arith.constant 0 : i32
    return %c0_i32, %c0_i32_0 : i32, i32
  }
  func.func @transform_6(%arg0: i32) -> (i32, i32) {
    %c0_i32 = arith.constant 0 : i32
    %c0_i32_0 = arith.constant 0 : i32
    %c0_i32_1 = arith.constant 0 : i32
    return %c0_i32, %c0_i32_0 : i32, i32
  }
  func.func @transform_7(%arg0: i32) -> (i32, i32) {
    %c0_i32 = arith.constant 0 : i32
    %c0_i32_0 = arith.constant 0 : i32
    return %arg0, %c0_i32 : i32, i32
  }
}

module attributes {stable_mosaic.version = 11 : i64} {
  func.func @kernel(%arg0: i32, %arg1: memref<8x2xf32, #tpu.memory_space<vmem>>, %arg2: memref<2x128xbf16, #tpu.memory_space<vmem>>, %arg3: memref<1x128xf32, #tpu.memory_space<vmem>>, %arg4: memref<2x128x128xbf16, #tpu.memory_space<vmem>>, %arg5: memref<2x1x128xf32, #tpu.memory_space<vmem>>, %arg6: memref<128x128xbf16, #tpu.memory_space<vmem>>, %arg7: memref<1x128xf32, #tpu.memory_space<vmem>>, %arg8: memref<8x128xbf16, #tpu.memory_space<vmem>>) attributes {dimension_semantics = [#tpu.dimension_semantics<parallel>], iteration_bounds = array<i64: 1>, scalar_prefetch = 0 : i64, scratch_operands = 0 : i64, tpu.core_type = #tpu.core_type<tc>, window_params = [{transform_indices = @transform_0, window_bounds = array<i64: 8, 2>}, {pipeline_mode = #tpu.pipeline_mode<synchronous>, transform_indices = @transform_1, window_bounds = array<i64: 2, 128>}, {pipeline_mode = #tpu.pipeline_mode<synchronous>, transform_indices = @transform_2, window_bounds = array<i64: 1, 128>}, {pipeline_mode = #tpu.pipeline_mode<synchronous>, transform_indices = @transform_3, window_bounds = array<i64: 2, 128, 128>}, {pipeline_mode = #tpu.pipeline_mode<synchronous>, transform_indices = @transform_4, window_bounds = array<i64: 2, 1, 128>}, {pipeline_mode = #tpu.pipeline_mode<synchronous>, transform_indices = @transform_5, window_bounds = array<i64: 128, 128>}, {pipeline_mode = #tpu.pipeline_mode<synchronous>, transform_indices = @transform_6, window_bounds = array<i64: 1, 128>}, {transform_indices = @transform_7, window_bounds = array<i64: 8, 128>}]} {
    %c0 = arith.constant 0 : index
    %c0_0 = arith.constant 0 : index
    %0 = vector.load %arg1[%c0, %c0_0] : memref<8x2xf32, #tpu.memory_space<vmem>>, vector<8x2xf32>
    %c0_1 = arith.constant 0 : index
    %c0_2 = arith.constant 0 : index
    %1 = vector.load %arg2[%c0_1, %c0_2] : memref<2x128xbf16, #tpu.memory_space<vmem>>, vector<2x128xbf16>
    %c0_3 = arith.constant 0 : index
    %c0_4 = arith.constant 0 : index
    %2 = vector.load %arg3[%c0_3, %c0_4] : memref<1x128xf32, #tpu.memory_space<vmem>>, vector<1x128xf32>
    %3 = arith.truncf %0 : vector<8x2xf32> to vector<8x2xbf16>
    %cst = arith.constant dense<0.000000e+00> : vector<8x128xf32>
    %4 = tpu.matmul %3, %1, %cst {dimension_numbers = #tpu.dot_dimension_numbers<[1], [0], [0], [1], [0, 0, 1, 1], [], []>} : vector<8x2xbf16>, vector<2x128xbf16>, vector<8x128xf32> -> vector<8x128xf32>
    %5 = vector.broadcast %2 : vector<1x128xf32> to vector<8x128xf32>
    %6 = arith.addf %4, %5 : vector<8x128xf32>
    %7 = arith.truncf %6 : vector<8x128xf32> to vector<8x128xbf16>
    %8 = math.tanh %7 : vector<8x128xbf16>
    %c0_5 = arith.constant 0 : index
    %c0_6 = arith.constant 0 : index
    %c0_7 = arith.constant 0 : index
    %9 = vector.load %arg4[%c0_5, %c0_6, %c0_7] : memref<2x128x128xbf16, #tpu.memory_space<vmem>>, vector<1x128x128xbf16>
    %10 = vector.shape_cast %9 : vector<1x128x128xbf16> to vector<128x128xbf16>
    %c0_8 = arith.constant 0 : index
    %c0_9 = arith.constant 0 : index
    %c0_10 = arith.constant 0 : index
    %11 = vector.load %arg5[%c0_8, %c0_9, %c0_10] : memref<2x1x128xf32, #tpu.memory_space<vmem>>, vector<1x1x128xf32>
    %12 = vector.shape_cast %11 : vector<1x1x128xf32> to vector<1x128xf32>
    %cst_11 = arith.constant dense<0.000000e+00> : vector<8x128xf32>
    %13 = tpu.matmul %8, %10, %cst_11 {dimension_numbers = #tpu.dot_dimension_numbers<[1], [0], [0], [1], [0, 0, 1, 1], [], []>} : vector<8x128xbf16>, vector<128x128xbf16>, vector<8x128xf32> -> vector<8x128xf32>
    %14 = vector.broadcast %12 : vector<1x128xf32> to vector<8x128xf32>
    %15 = arith.addf %13, %14 : vector<8x128xf32>
    %16 = arith.truncf %15 : vector<8x128xf32> to vector<8x128xbf16>
    %17 = math.tanh %16 : vector<8x128xbf16>
    %c1 = arith.constant 1 : index
    %c0_12 = arith.constant 0 : index
    %c0_13 = arith.constant 0 : index
    %18 = vector.load %arg4[%c1, %c0_12, %c0_13] : memref<2x128x128xbf16, #tpu.memory_space<vmem>>, vector<1x128x128xbf16>
    %19 = vector.shape_cast %18 : vector<1x128x128xbf16> to vector<128x128xbf16>
    %c1_14 = arith.constant 1 : index
    %c0_15 = arith.constant 0 : index
    %c0_16 = arith.constant 0 : index
    %20 = vector.load %arg5[%c1_14, %c0_15, %c0_16] : memref<2x1x128xf32, #tpu.memory_space<vmem>>, vector<1x1x128xf32>
    %21 = vector.shape_cast %20 : vector<1x1x128xf32> to vector<1x128xf32>
    %cst_17 = arith.constant dense<0.000000e+00> : vector<8x128xf32>
    %22 = tpu.matmul %17, %19, %cst_17 {dimension_numbers = #tpu.dot_dimension_numbers<[1], [0], [0], [1], [0, 0, 1, 1], [], []>} : vector<8x128xbf16>, vector<128x128xbf16>, vector<8x128xf32> -> vector<8x128xf32>
    %23 = vector.broadcast %21 : vector<1x128xf32> to vector<8x128xf32>
    %24 = arith.addf %22, %23 : vector<8x128xf32>
    %25 = arith.truncf %24 : vector<8x128xf32> to vector<8x128xbf16>
    %26 = math.tanh %25 : vector<8x128xbf16>
    %c0_18 = arith.constant 0 : index
    %c0_19 = arith.constant 0 : index
    %27 = vector.load %arg6[%c0_18, %c0_19] : memref<128x128xbf16, #tpu.memory_space<vmem>>, vector<128x128xbf16>
    %cst_20 = arith.constant dense<0.000000e+00> : vector<8x128xf32>
    %28 = tpu.matmul %26, %27, %cst_20 {dimension_numbers = #tpu.dot_dimension_numbers<[1], [0], [0], [1], [0, 0, 1, 1], [], []>} : vector<8x128xbf16>, vector<128x128xbf16>, vector<8x128xf32> -> vector<8x128xf32>
    %c0_21 = arith.constant 0 : index
    %c0_22 = arith.constant 0 : index
    %29 = vector.load %arg7[%c0_21, %c0_22] : memref<1x128xf32, #tpu.memory_space<vmem>>, vector<1x128xf32>
    %30 = vector.broadcast %29 : vector<1x128xf32> to vector<8x128xf32>
    %31 = arith.addf %28, %30 : vector<8x128xf32>
    %32 = arith.truncf %31 : vector<8x128xf32> to vector<8x128xbf16>
    %c0_23 = arith.constant 0 : index
    %c0_24 = arith.constant 0 : index
    %33 = vector.load %arg8[%c0_23, %c0_24] : memref<8x128xbf16, #tpu.memory_space<vmem>>, vector<8x128xbf16>
    tpu.vector_store %arg8[%c0_23, %c0_24], %32 {strides = array<i32>} : memref<8x128xbf16, #tpu.memory_space<vmem>>, vector<8x128xbf16>,
    return
  }
  func.func @transform_0(%arg0: i32) -> (i32, i32) {
    %c0_i32 = arith.constant 0 : i32
    %c0_i32_0 = arith.constant 0 : i32
    return %arg0, %c0_i32 : i32, i32
  }
  func.func @transform_1(%arg0: i32) -> (i32, i32) {
    %c0_i32 = arith.constant 0 : i32
    %c0_i32_0 = arith.constant 0 : i32
    %c0_i32_1 = arith.constant 0 : i32
    return %c0_i32, %c0_i32_0 : i32, i32
  }
  func.func @transform_2(%arg0: i32) -> (i32, i32) {
    %c0_i32 = arith.constant 0 : i32
    %c0_i32_0 = arith.constant 0 : i32
    %c0_i32_1 = arith.constant 0 : i32
    return %c0_i32, %c0_i32_0 : i32, i32
  }
  func.func @transform_3(%arg0: i32) -> (i32, i32, i32) {
    %c0_i32 = arith.constant 0 : i32
    %c0_i32_0 = arith.constant 0 : i32
    %c0_i32_1 = arith.constant 0 : i32
    %c0_i32_2 = arith.constant 0 : i32
    return %c0_i32, %c0_i32_0, %c0_i32_1 : i32, i32, i32
  }
  func.func @transform_4(%arg0: i32) -> (i32, i32, i32) {
    %c0_i32 = arith.constant 0 : i32
    %c0_i32_0 = arith.constant 0 : i32
    %c0_i32_1 = arith.constant 0 : i32
    %c0_i32_2 = arith.constant 0 : i32
    return %c0_i32, %c0_i32_0, %c0_i32_1 : i32, i32, i32
  }
  func.func @transform_5(%arg0: i32) -> (i32, i32) {
    %c0_i32 = arith.constant 0 : i32
    %c0_i32_0 = arith.constant 0 : i32
    %c0_i32_1 = arith.constant 0 : i32
    return %c0_i32, %c0_i32_0 : i32, i32
  }
  func.func @transform_6(%arg0: i32) -> (i32, i32) {
    %c0_i32 = arith.constant 0 : i32
    %c0_i32_0 = arith.constant 0 : i32
    %c0_i32_1 = arith.constant 0 : i32
    return %c0_i32, %c0_i32_0 : i32, i32
  }
  func.func @transform_7(%arg0: i32) -> (i32, i32) {
    %c0_i32 = arith.constant 0 : i32
    %c0_i32_0 = arith.constant 0 : i32
    return %arg0, %c0_i32 : i32, i32
  }
}

</mosaic_0001>

<llo_original>
// kernel: _forward_jit.1
$region0: #{_forward_jit.1}
  #allocation0 [shape = 'u32[]', space=smem, size = 0x4, offset = 0x4, fixed_abs, tag = 'smem constant byte address 0x4 - core index']
  #allocation1 [shape = 'u32[72,128]{1,0:T(1,128)}', space=vmem, size = 0x9000, scoped, tag = 'internal scratch']
  %s0 = inlined_call_operand.vmem [shape: f32[8,2], index: 0, kind: input, shape index: {}]
  %s1 = inlined_call_operand.vmem [shape: bf16[2,128], index: 1, kind: input, shape index: {}]
  %s2 = inlined_call_operand.vmem [shape: f32[1,128], index: 2, kind: input, shape index: {}]
  %s3 = inlined_call_operand.hbm [shape: bf16[2,128,128], index: 3, kind: input, shape index: {}]
  %s4 = inlined_call_operand.vmem [shape: f32[2,1,128], index: 4, kind: input, shape index: {}]
  %s5 = inlined_call_operand.hbm [shape: bf16[128,128], index: 5, kind: input, shape index: {}]
  %s6 = inlined_call_operand.vmem [shape: f32[1,128], index: 6, kind: input, shape index: {}]
  %s7 = inlined_call_operand.vmem [shape: bf16[8,128], index: 7, kind: output, shape index: {}]
  %s8 = sld [smem:[#allocation0]]
  $region46: #{_forward_jit.1} parent=0
    _
  %s10 = ssub.s32 1, %s8
  %s11 = scalar_select 0, %s10, %s8
  $region1: #{_forward_jit.1} parent=0
    #allocation2 [shape = 'u8[65536]{0}', space=vmem, size = 0x10000, scoped, tag = 'input window, operand 3, single buffered']
    #allocation3 [shape = 's32[1]{0}', space=sflag, size = 0x4, scoped, tag = 'scoped memory for _forward_jit.1']
    #allocation4 [shape = 'u8[32768]{0}', space=vmem, size = 0x8000, scoped, tag = 'input window, operand 5, single buffered']
    #allocation5 [shape = 's32[1]{0}', space=sflag, size = 0x4, scoped, tag = 'scoped memory for _forward_jit.1']
    %12 = vsyncpa [#allocation3], 0
    %13 = vsyncpa [#allocation5], 0
    // Predicated region
    $region2: #{_forward_jit.1} parent=1 // pred_check
      _
    $region3: #{_forward_jit.1} parent=1 // pred_check_branch
      %15 = sbr.rel (0) target = $region5
    $region4: #{_forward_jit.1} parent=1 // pred_region
      _
    $region5: #{_forward_jit.1} parent=1 // pred_fallthru
      _
    // Predicated region
    $region6: #{_forward_jit.1} parent=1 // pred_check
      _
    $region7: #{_forward_jit.1} parent=1 // pred_check_branch
      %17 = sbr.rel (0) target = $region9
    $region8: #{_forward_jit.1} parent=1 // pred_region
      _
    $region9: #{_forward_jit.1} parent=1 // pred_fallthru
      _
    // Predicated region
    $region10: #{_forward_jit.1} parent=1 // pred_check
      _
    $region11: #{_forward_jit.1} parent=1 // pred_check_branch
      %19 = sbr.rel (0) target = $region13
    $region12: #{_forward_jit.1} parent=1 // pred_region
      _
    $region13: #{_forward_jit.1} parent=1 // pred_fallthru
      _
    // Predicated region
    $region14: #{_forward_jit.1} parent=1 // pred_check
      _
    $region15: #{_forward_jit.1} parent=1 // pred_check_branch
      %21 = sbr.rel (0) target = $region17
    $region16: #{_forward_jit.1} parent=1 // pred_region
      %23 = vsyncadd [#allocation3], 0
      %s24 = sshll.u32 %s3, 4
      %s25 = int_to_ptr.hbm [resolvable:$true] %s24
      %s26 = sshll.u32 [#allocation2], 4
      %s27 = int_to_ptr.vmem [resolvable:$true] %s26
      %32 = dma.hbm_to_vmem [thread:$0]  %s25, 2048, %s27, [#allocation3], 64, 64, 4
    $region17: #{_forward_jit.1} parent=1 // pred_fallthru
      _
    // Predicated region
    $region18: #{_forward_jit.1} parent=1 // pred_check
      _
    $region19: #{_forward_jit.1} parent=1 // pred_check_branch
      %34 = sbr.rel (0) target = $region21
    $region20: #{_forward_jit.1} parent=1 // pred_region
      _
    $region21: #{_forward_jit.1} parent=1 // pred_fallthru
      _
    // Predicated region
    $region22: #{_forward_jit.1} parent=1 // pred_check
      _
    $region23: #{_forward_jit.1} parent=1 // pred_check_branch
      %36 = sbr.rel (0) target = $region25
    $region24: #{_forward_jit.1} parent=1 // pred_region
      %38 = vsyncadd [#allocation5], 0
      %s39 = sshll.u32 %s5, 4
      %s40 = int_to_ptr.hbm [resolvable:$true] %s39
      %s41 = sshll.u32 [#allocation4], 4
      %s42 = int_to_ptr.vmem [resolvable:$true] %s41
      %47 = dma.hbm_to_vmem [thread:$0]  %s40, 1024, %s42, [#allocation5], 64, 64, 4
    $region25: #{_forward_jit.1} parent=1 // pred_fallthru
      _
    // Predicated region
    $region26: #{_forward_jit.1} parent=1 // pred_check
      _
    $region27: #{_forward_jit.1} parent=1 // pred_check_branch
      %49 = sbr.rel (0) target = $region29
    $region28: #{_forward_jit.1} parent=1 // pred_region
      _
    $region29: #{_forward_jit.1} parent=1 // pred_fallthru
      _
    // Predicated region
    $region30: #{_forward_jit.1} parent=1 // pred_check
      _
    $region31: #{_forward_jit.1} parent=1 // pred_check_branch
      %51 = sbr.rel (0) target = $region33
    $region32: #{_forward_jit.1} parent=1 // pred_region
      %53 = dma.done [#allocation3], 2048
    $region33: #{_forward_jit.1} parent=1 // pred_fallthru
      _
    // Predicated region
    $region34: #{_forward_jit.1} parent=1 // pred_check
      _
    $region35: #{_forward_jit.1} parent=1 // pred_check_branch
      %55 = sbr.rel (0) target = $region37
    $region36: #{_forward_jit.1} parent=1 // pred_region
      %57 = dma.done [#allocation5], 1024
    $region37: #{_forward_jit.1} parent=1 // pred_fallthru
      _
    %v59 = vld [vmem:[%s0] sm:$0xff]
    %v60 = vld [vmem:[%s1] sm:$0x1]
    %v61 = vld [vmem:[%s2] sm:$0x1]
    %v62 = vpack.c.bf16 %v59, %v59
    %v64 = vperm.slane %v61, 0
    %vm66 = vcmask 15360
    %v68 = vsel %vm66, %v62, 0
    %vm70 = vcmask 1040384
    %v72 = vsel %vm70, %v60, 0
    %74 = vmatpush.bf16.msra.mxu0 0
    %75 = vmatpush.bf16.msra.mxu0 0
    %76 = vmatpush.bf16.msra.mxu0 0
    %77 = vmatpush.bf16.msra.mxu0 0
    %78 = vmatpush.bf16.msra.mxu0 0
    %79 = vmatpush.bf16.msra.mxu0 0
    %80 = vmatpush.bf16.msra.mxu0 0
    %81 = vmatpush.bf16.msra.mxu0 %v72
    %82 = vmatmul.bf16.gmra.mxu0 %v68
    %v83 = vpop.f32.mrf.mxu0
    %v84 = vadd.f32 %v64, %v83
    %v85 = vpop.f32.mrf.mxu0
    %86 = vdwg.mxu0
    %v87 = vpack.c.bf16 %v84, %v84
    %v88 = vunpack.c.l.bf16 %v87
    %v89 = vtanh.pop %v88
    %v90 = vpack.c.bf16 %v89, %v89
    %v91 = vld [vmem:[#allocation2] sm:$0xf]
    %v92 = vld [vmem:[#allocation2 + $0x4] sm:$0xf]
    %v93 = vld [vmem:[#allocation2 + $0x8] sm:$0xf]
    %v94 = vld [vmem:[#allocation2 + $0xc] sm:$0xf]
    %v95 = vld [vmem:[#allocation2 + $0x10] sm:$0xf]
    %v96 = vld [vmem:[#allocation2 + $0x14] sm:$0xf]
    %v97 = vld [vmem:[#allocation2 + $0x18] sm:$0xf]
    %v98 = vld [vmem:[#allocation2 + $0x1c] sm:$0xf]
    %v99 = vld [vmem:[#allocation2 + $0x20] sm:$0xf]
    %v100 = vld [vmem:[#allocation2 + $0x24] sm:$0xf]
    %v101 = vld [vmem:[#allocation2 + $0x28] sm:$0xf]
    %v102 = vld [vmem:[#allocation2 + $0x2c] sm:$0xf]
    %v103 = vld [vmem:[#allocation2 + $0x30] sm:$0xf]
    %v104 = vld [vmem:[#allocation2 + $0x34] sm:$0xf]
    %v105 = vld [vmem:[#allocation2 + $0x38] sm:$0xf]
    %v106 = vld [vmem:[#allocation2 + $0x3c] sm:$0xf]
    %v107 = vld [vmem:[%s4] sm:$0x1]
    %v109 = vperm.slane %v107, 0
    %v127 = vunpack.c.l.b16 %v91
    %v128 = vunpack.c.l.b16 %v92
    %v129 = vunpack.c.l.b16 %v93
    %v130 = vunpack.c.l.b16 %v94
    %v131 = vunpack.c.l.b16 %v95
    %v132 = vunpack.c.l.b16 %v96
    %v133 = vunpack.c.l.b16 %v97
    %v134 = vunpack.c.l.b16 %v98
    %v135 = vunpack.c.l.b16 %v99
    %v136 = vunpack.c.l.b16 %v100
    %v137 = vunpack.c.l.b16 %v101
    %v138 = vunpack.c.l.b16 %v102
    %v139 = vunpack.c.l.b16 %v103
    %v140 = vunpack.c.l.b16 %v104
    %v141 = vunpack.c.l.b16 %v105
    %v142 = vunpack.c.l.b16 %v106
    %v143 = vpack.c.b16 %v128, %v127
    %v144 = vpack.c.b16 %v130, %v129
    %v145 = vpack.c.b16 %v132, %v131
    %v146 = vpack.c.b16 %v134, %v133
    %v147 = vpack.c.b16 %v136, %v135
    %v148 = vpack.c.b16 %v138, %v137
    %v149 = vpack.c.b16 %v140, %v139
    %v150 = vpack.c.b16 %v142, %v141
    %159 = vmatpush.bf16.msra.mxu0 %v150
    %160 = vmatpush.bf16.msra.mxu0 %v149
    %161 = vmatpush.bf16.msra.mxu0 %v148
    %162 = vmatpush.bf16.msra.mxu0 %v147
    %163 = vmatpush.bf16.msra.mxu0 %v146
    %164 = vmatpush.bf16.msra.mxu0 %v145
    %165 = vmatpush.bf16.msra.mxu0 %v144
    %166 = vmatpush.bf16.msra.mxu0 %v143
    %167 = vmatmul.bf16.gmra.mxu0 %v90
    %v168 = vpop.f32.mrf.mxu0
    %v169 = vadd.f32 %v109, %v168
    %v170 = vpop.f32.mrf.mxu0
    %171 = vdwg.mxu0
    %v172 = vpack.c.bf16 %v169, %v169
    %v173 = vunpack.c.l.bf16 %v172
    %v174 = vtanh.pop %v173
    %v175 = vpack.c.bf16 %v174, %v174
    %s176 = scalar_lea.vmem [#allocation2], 64
    %v177 = vld [vmem:[%s176] sm:$0xf]
    %v178 = vld [vmem:[%s176 + $0x4] sm:$0xf]
    %v179 = vld [vmem:[%s176 + $0x8] sm:$0xf]
    %v180 = vld [vmem:[%s176 + $0xc] sm:$0xf]
    %v181 = vld [vmem:[%s176 + $0x10] sm:$0xf]
    %v182 = vld [vmem:[%s176 + $0x14] sm:$0xf]
    %v183 = vld [vmem:[%s176 + $0x18] sm:$0xf]
    %v184 = vld [vmem:[%s176 + $0x1c] sm:$0xf]
    %v185 = vld [vmem:[%s176 + $0x20] sm:$0xf]
    %v186 = vld [vmem:[%s176 + $0x24] sm:$0xf]
    %v187 = vld [vmem:[%s176 + $0x28] sm:$0xf]
    %v188 = vld [vmem:[%s176 + $0x2c] sm:$0xf]
    %v189 = vld [vmem:[%s176 + $0x30] sm:$0xf]
    %v190 = vld [vmem:[%s176 + $0x34] sm:$0xf]
    %v191 = vld [vmem:[%s176 + $0x38] sm:$0xf]
    %v192 = vld [vmem:[%s176 + $0x3c] sm:$0xf]
    %s193 = scalar_lea.vmem %s4, 1
    %v194 = vld [vmem:[%s193] sm:$0x1]
    %v196 = vperm.slane %v194, 0
    %v214 = vunpack.c.l.b16 %v177
    %v215 = vunpack.c.l.b16 %v178
    %v216 = vunpack.c.l.b16 %v179
    %v217 = vunpack.c.l.b16 %v180
    %v218 = vunpack.c.l.b16 %v181
    %v219 = vunpack.c.l.b16 %v182
    %v220 = vunpack.c.l.b16 %v183
    %v221 = vunpack.c.l.b16 %v184
    %v222 = vunpack.c.l.b16 %v185
    %v223 = vunpack.c.l.b16 %v186
    %v224 = vunpack.c.l.b16 %v187
    %v225 = vunpack.c.l.b16 %v188
    %v226 = vunpack.c.l.b16 %v189
    %v227 = vunpack.c.l.b16 %v190
    %v228 = vunpack.c.l.b16 %v191
    %v229 = vunpack.c.l.b16 %v192
    %v230 = vpack.c.b16 %v215, %v214
    %v231 = vpack.c.b16 %v217, %v216
    %v232 = vpack.c.b16 %v219, %v218
    %v233 = vpack.c.b16 %v221, %v220
    %v234 = vpack.c.b16 %v223, %v222
    %v235 = vpack.c.b16 %v225, %v224
    %v236 = vpack.c.b16 %v227, %v226
    %v237 = vpack.c.b16 %v229, %v228
    %246 = vmatpush.bf16.msra.mxu0 %v237
    %247 = vmatpush.bf16.msra.mxu0 %v236
    %248 = vmatpush.bf16.msra.mxu0 %v235
    %249 = vmatpush.bf16.msra.mxu0 %v234
    %250 = vmatpush.bf16.msra.mxu0 %v233
    %251 = vmatpush.bf16.msra.mxu0 %v232
    %252 = vmatpush.bf16.msra.mxu0 %v231
    %253 = vmatpush.bf16.msra.mxu0 %v230
    %254 = vmatmul.bf16.gmra.mxu0 %v175
    %v255 = vpop.f32.mrf.mxu0
    %v256 = vadd.f32 %v196, %v255
    %v257 = vpop.f32.mrf.mxu0
    %258 = vdwg.mxu0
    %v259 = vpack.c.bf16 %v256, %v256
    %v260 = vunpack.c.l.bf16 %v259
    %v261 = vtanh.pop %v260
    %v262 = vpack.c.bf16 %v261, %v261
    %v263 = vld [vmem:[#allocation4] sm:$0xf]
    %v264 = vld [vmem:[#allocation4 + $0x4] sm:$0xf]
    %v265 = vld [vmem:[#allocation4 + $0x8] sm:$0xf]
    %v266 = vld [vmem:[#allocation4 + $0xc] sm:$0xf]
    %v267 = vld [vmem:[#allocation4 + $0x10] sm:$0xf]
    %v268 = vld [vmem:[#allocation4 + $0x14] sm:$0xf]
    %v269 = vld [vmem:[#allocation4 + $0x18] sm:$0xf]
    %v270 = vld [vmem:[#allocation4 + $0x1c] sm:$0xf]
    %v271 = vld [vmem:[#allocation4 + $0x20] sm:$0xf]
    %v272 = vld [vmem:[#allocation4 + $0x24] sm:$0xf]
    %v273 = vld [vmem:[#allocation4 + $0x28] sm:$0xf]
    %v274 = vld [vmem:[#allocation4 + $0x2c] sm:$0xf]
    %v275 = vld [vmem:[#allocation4 + $0x30] sm:$0xf]
    %v276 = vld [vmem:[#allocation4 + $0x34] sm:$0xf]
    %v277 = vld [vmem:[#allocation4 + $0x38] sm:$0xf]
    %v278 = vld [vmem:[#allocation4 + $0x3c] sm:$0xf]
    %v279 = vld [vmem:[%s6] sm:$0x1]
    %v281 = vperm.slane %v279, 0
    %v299 = vunpack.c.l.b16 %v263
    %v300 = vunpack.c.l.b16 %v264
    %v301 = vunpack.c.l.b16 %v265
    %v302 = vunpack.c.l.b16 %v266
    %v303 = vunpack.c.l.b16 %v267
    %v304 = vunpack.c.l.b16 %v268
    %v305 = vunpack.c.l.b16 %v269
    %v306 = vunpack.c.l.b16 %v270
    %v307 = vunpack.c.l.b16 %v271
    %v308 = vunpack.c.l.b16 %v272
    %v309 = vunpack.c.l.b16 %v273
    %v310 = vunpack.c.l.b16 %v274
    %v311 = vunpack.c.l.b16 %v275
    %v312 = vunpack.c.l.b16 %v276
    %v313 = vunpack.c.l.b16 %v277
    %v314 = vunpack.c.l.b16 %v278
    %v315 = vpack.c.b16 %v300, %v299
    %v316 = vpack.c.b16 %v302, %v301
    %v317 = vpack.c.b16 %v304, %v303
    %v318 = vpack.c.b16 %v306, %v305
    %v319 = vpack.c.b16 %v308, %v307
    %v320 = vpack.c.b16 %v310, %v309
    %v321 = vpack.c.b16 %v312, %v311
    %v322 = vpack.c.b16 %v314, %v313
    %331 = vmatpush.bf16.msra.mxu0 %v322
    %332 = vmatpush.bf16.msra.mxu0 %v321
    %333 = vmatpush.bf16.msra.mxu0 %v320
    %334 = vmatpush.bf16.msra.mxu0 %v319
    %335 = vmatpush.bf16.msra.mxu0 %v318
    %336 = vmatpush.bf16.msra.mxu0 %v317
    %337 = vmatpush.bf16.msra.mxu0 %v316
    %338 = vmatpush.bf16.msra.mxu0 %v315
    %339 = vmatmul.bf16.gmra.mxu0 %v262
    %v340 = vpop.f32.mrf.mxu0
    %v341 = vadd.f32 %v281, %v340
    %v342 = vpop.f32.mrf.mxu0
    %343 = vdwg.mxu0
    %v344 = vpack.c.bf16 %v341, %v341
    %345 = vst [vmem:[%s7] sm:$0xf] %v344
    // Predicated region
    $region38: #{_forward_jit.1} parent=1 // pred_check
      _
    $region39: #{_forward_jit.1} parent=1 // pred_check_branch
      %347 = sbr.rel (0) target = $region41
    $region40: #{_forward_jit.1} parent=1 // pred_region
      _
    $region41: #{_forward_jit.1} parent=1 // pred_fallthru
      _
    // Predicated region
    $region42: #{_forward_jit.1} parent=1 // pred_check
      _
    $region43: #{_forward_jit.1} parent=1 // pred_check_branch
      %349 = sbr.rel (0) target = $region45
    $region44: #{_forward_jit.1} parent=1 // pred_region
      _
    $region45: #{_forward_jit.1} parent=1 // pred_fallthru
      _
    %350 = vsyncpa [#allocation3], 1
    %351 = vsyncpa [#allocation5], 1

// kernel: _forward_jit.1
$region0: #{_forward_jit.1}
  #allocation0 [shape = 'u32[]', space=smem, size = 0x4, offset = 0x4, fixed_abs, tag = 'smem constant byte address 0x4 - core index']
  #allocation1 [shape = 'u32[72,128]{1,0:T(1,128)}', space=vmem, size = 0x9000, scoped, tag = 'internal scratch']
  %s0 = inlined_call_operand.vmem [shape: f32[8,2], index: 0, kind: input, shape index: {}]
  %s1 = inlined_call_operand.vmem [shape: bf16[2,128], index: 1, kind: input, shape index: {}]
  %s2 = inlined_call_operand.vmem [shape: f32[1,128], index: 2, kind: input, shape index: {}]
  %s3 = inlined_call_operand.hbm [shape: bf16[2,128,128], index: 3, kind: input, shape index: {}]
  %s4 = inlined_call_operand.vmem [shape: f32[2,1,128], index: 4, kind: input, shape index: {}]
  %s5 = inlined_call_operand.hbm [shape: bf16[128,128], index: 5, kind: input, shape index: {}]
  %s6 = inlined_call_operand.vmem [shape: f32[1,128], index: 6, kind: input, shape index: {}]
  %s7 = inlined_call_operand.vmem [shape: bf16[8,128], index: 7, kind: output, shape index: {}]
  %s8 = sld [smem:[#allocation0]]
  $region46: #{_forward_jit.1} parent=0
    _
  %s10 = ssub.s32 1, %s8
  %s11 = scalar_select 0, %s10, %s8
  $region1: #{_forward_jit.1} parent=0
    #allocation2 [shape = 'u8[65536]{0}', space=vmem, size = 0x10000, scoped, tag = 'input window, operand 3, single buffered']
    #allocation3 [shape = 's32[1]{0}', space=sflag, size = 0x4, scoped, tag = 'scoped memory for _forward_jit.1']
    #allocation4 [shape = 'u8[32768]{0}', space=vmem, size = 0x8000, scoped, tag = 'input window, operand 5, single buffered']
    #allocation5 [shape = 's32[1]{0}', space=sflag, size = 0x4, scoped, tag = 'scoped memory for _forward_jit.1']
    %12 = vsyncpa [#allocation3], 0
    %13 = vsyncpa [#allocation5], 0
    // Predicated region
    $region2: #{_forward_jit.1} parent=1 // pred_check
      _
    $region3: #{_forward_jit.1} parent=1 // pred_check_branch
      %15 = sbr.rel (0) target = $region5
    $region4: #{_forward_jit.1} parent=1 // pred_region
      _
    $region5: #{_forward_jit.1} parent=1 // pred_fallthru
      _
    // Predicated region
    $region6: #{_forward_jit.1} parent=1 // pred_check
      _
    $region7: #{_forward_jit.1} parent=1 // pred_check_branch
      %17 = sbr.rel (0) target = $region9
    $region8: #{_forward_jit.1} parent=1 // pred_region
      _
    $region9: #{_forward_jit.1} parent=1 // pred_fallthru
      _
    // Predicated region
    $region10: #{_forward_jit.1} parent=1 // pred_check
      _
    $region11: #{_forward_jit.1} parent=1 // pred_check_branch
      %19 = sbr.rel (0) target = $region13
    $region12: #{_forward_jit.1} parent=1 // pred_region
      _
    $region13: #{_forward_jit.1} parent=1 // pred_fallthru
      _
    // Predicated region
    $region14: #{_forward_jit.1} parent=1 // pred_check
      _
    $region15: #{_forward_jit.1} parent=1 // pred_check_branch
      %21 = sbr.rel (0) target = $region17
    $region16: #{_forward_jit.1} parent=1 // pred_region
      %23 = vsyncadd [#allocation3], 0
      %s24 = sshll.u32 %s3, 4
      %s25 = int_to_ptr.hbm [resolvable:$true] %s24
      %s26 = sshll.u32 [#allocation2], 4
      %s27 = int_to_ptr.vmem [resolvable:$true] %s26
      %32 = dma.hbm_to_vmem [thread:$0]  %s25, 2048, %s27, [#allocation3], 64, 64, 4
    $region17: #{_forward_jit.1} parent=1 // pred_fallthru
      _
    // Predicated region
    $region18: #{_forward_jit.1} parent=1 // pred_check
      _
    $region19: #{_forward_jit.1} parent=1 // pred_check_branch
      %34 = sbr.rel (0) target = $region21
    $region20: #{_forward_jit.1} parent=1 // pred_region
      _
    $region21: #{_forward_jit.1} parent=1 // pred_fallthru
      _
    // Predicated region
    $region22: #{_forward_jit.1} parent=1 // pred_check
      _
    $region23: #{_forward_jit.1} parent=1 // pred_check_branch
      %36 = sbr.rel (0) target = $region25
    $region24: #{_forward_jit.1} parent=1 // pred_region
      %38 = vsyncadd [#allocation5], 0
      %s39 = sshll.u32 %s5, 4
      %s40 = int_to_ptr.hbm [resolvable:$true] %s39
      %s41 = sshll.u32 [#allocation4], 4
      %s42 = int_to_ptr.vmem [resolvable:$true] %s41
      %47 = dma.hbm_to_vmem [thread:$0]  %s40, 1024, %s42, [#allocation5], 64, 64, 4
    $region25: #{_forward_jit.1} parent=1 // pred_fallthru
      _
    // Predicated region
    $region26: #{_forward_jit.1} parent=1 // pred_check
      _
    $region27: #{_forward_jit.1} parent=1 // pred_check_branch
      %49 = sbr.rel (0) target = $region29
    $region28: #{_forward_jit.1} parent=1 // pred_region
      _
    $region29: #{_forward_jit.1} parent=1 // pred_fallthru
      _
    // Predicated region
    $region30: #{_forward_jit.1} parent=1 // pred_check
      _
    $region31: #{_forward_jit.1} parent=1 // pred_check_branch
      %51 = sbr.rel (0) target = $region33
    $region32: #{_forward_jit.1} parent=1 // pred_region
      %53 = dma.done [#allocation3], 2048
    $region33: #{_forward_jit.1} parent=1 // pred_fallthru
      _
    // Predicated region
    $region34: #{_forward_jit.1} parent=1 // pred_check
      _
    $region35: #{_forward_jit.1} parent=1 // pred_check_branch
      %55 = sbr.rel (0) target = $region37
    $region36: #{_forward_jit.1} parent=1 // pred_region
      %57 = dma.done [#allocation5], 1024
    $region37: #{_forward_jit.1} parent=1 // pred_fallthru
      _
    %v59 = vld [vmem:[%s0] sm:$0xff]
    %v60 = vld [vmem:[%s1] sm:$0x1]
    %v61 = vld [vmem:[%s2] sm:$0x1]
    %v62 = vpack.c.bf16 %v59, %v59
    %v64 = vperm.slane %v61, 0
    %vm66 = vcmask 15360
    %v68 = vsel %vm66, %v62, 0
    %vm70 = vcmask 1040384
    %v72 = vsel %vm70, %v60, 0
    %74 = vmatpush.bf16.msra.mxu0 0
    %75 = vmatpush.bf16.msra.mxu0 0
    %76 = vmatpush.bf16.msra.mxu0 0
    %77 = vmatpush.bf16.msra.mxu0 0
    %78 = vmatpush.bf16.msra.mxu0 0
    %79 = vmatpush.bf16.msra.mxu0 0
    %80 = vmatpush.bf16.msra.mxu0 0
    %81 = vmatpush.bf16.msra.mxu0 %v72
    %82 = vmatmul.bf16.gmra.mxu0 %v68
    %v83 = vpop.f32.mrf.mxu0
    %v84 = vadd.f32 %v64, %v83
    %v85 = vpop.f32.mrf.mxu0
    %86 = vdwg.mxu0
    %v87 = vpack.c.bf16 %v84, %v84
    %v88 = vunpack.c.l.bf16 %v87
    %v89 = vtanh.pop %v88
    %v90 = vpack.c.bf16 %v89, %v89
    %v91 = vld [vmem:[#allocation2] sm:$0xf]
    %v92 = vld [vmem:[#allocation2 + $0x4] sm:$0xf]
    %v93 = vld [vmem:[#allocation2 + $0x8] sm:$0xf]
    %v94 = vld [vmem:[#allocation2 + $0xc] sm:$0xf]
    %v95 = vld [vmem:[#allocation2 + $0x10] sm:$0xf]
    %v96 = vld [vmem:[#allocation2 + $0x14] sm:$0xf]
    %v97 = vld [vmem:[#allocation2 + $0x18] sm:$0xf]
    %v98 = vld [vmem:[#allocation2 + $0x1c] sm:$0xf]
    %v99 = vld [vmem:[#allocation2 + $0x20] sm:$0xf]
    %v100 = vld [vmem:[#allocation2 + $0x24] sm:$0xf]
    %v101 = vld [vmem:[#allocation2 + $0x28] sm:$0xf]
    %v102 = vld [vmem:[#allocation2 + $0x2c] sm:$0xf]
    %v103 = vld [vmem:[#allocation2 + $0x30] sm:$0xf]
    %v104 = vld [vmem:[#allocation2 + $0x34] sm:$0xf]
    %v105 = vld [vmem:[#allocation2 + $0x38] sm:$0xf]
    %v106 = vld [vmem:[#allocation2 + $0x3c] sm:$0xf]
    %v107 = vld [vmem:[%s4] sm:$0x1]
    %v109 = vperm.slane %v107, 0
    %v127 = vunpack.c.l.b16 %v91
    %v128 = vunpack.c.l.b16 %v92
    %v129 = vunpack.c.l.b16 %v93
    %v130 = vunpack.c.l.b16 %v94
    %v131 = vunpack.c.l.b16 %v95
    %v132 = vunpack.c.l.b16 %v96
    %v133 = vunpack.c.l.b16 %v97
    %v134 = vunpack.c.l.b16 %v98
    %v135 = vunpack.c.l.b16 %v99
    %v136 = vunpack.c.l.b16 %v100
    %v137 = vunpack.c.l.b16 %v101
    %v138 = vunpack.c.l.b16 %v102
    %v139 = vunpack.c.l.b16 %v103
    %v140 = vunpack.c.l.b16 %v104
    %v141 = vunpack.c.l.b16 %v105
    %v142 = vunpack.c.l.b16 %v106
    %v143 = vpack.c.b16 %v128, %v127
    %v144 = vpack.c.b16 %v130, %v129
    %v145 = vpack.c.b16 %v132, %v131
    %v146 = vpack.c.b16 %v134, %v133
    %v147 = vpack.c.b16 %v136, %v135
    %v148 = vpack.c.b16 %v138, %v137
    %v149 = vpack.c.b16 %v140, %v139
    %v150 = vpack.c.b16 %v142, %v141
    %159 = vmatpush.bf16.msra.mxu0 %v150
    %160 = vmatpush.bf16.msra.mxu0 %v149
    %161 = vmatpush.bf16.msra.mxu0 %v148
    %162 = vmatpush.bf16.msra.mxu0 %v147
    %163 = vmatpush.bf16.msra.mxu0 %v146
    %164 = vmatpush.bf16.msra.mxu0 %v145
    %165 = vmatpush.bf16.msra.mxu0 %v144
    %166 = vmatpush.bf16.msra.mxu0 %v143
    %167 = vmatmul.bf16.gmra.mxu0 %v90
    %v168 = vpop.f32.mrf.mxu0
    %v169 = vadd.f32 %v109, %v168
    %v170 = vpop.f32.mrf.mxu0
    %171 = vdwg.mxu0
    %v172 = vpack.c.bf16 %v169, %v169
    %v173 = vunpack.c.l.bf16 %v172
    %v174 = vtanh.pop %v173
    %v175 = vpack.c.bf16 %v174, %v174
    %s176 = scalar_lea.vmem [#allocation2], 64
    %v177 = vld [vmem:[%s176] sm:$0xf]
    %v178 = vld [vmem:[%s176 + $0x4] sm:$0xf]
    %v179 = vld [vmem:[%s176 + $0x8] sm:$0xf]
    %v180 = vld [vmem:[%s176 + $0xc] sm:$0xf]
    %v181 = vld [vmem:[%s176 + $0x10] sm:$0xf]
    %v182 = vld [vmem:[%s176 + $0x14] sm:$0xf]
    %v183 = vld [vmem:[%s176 + $0x18] sm:$0xf]
    %v184 = vld [vmem:[%s176 + $0x1c] sm:$0xf]
    %v185 = vld [vmem:[%s176 + $0x20] sm:$0xf]
    %v186 = vld [vmem:[%s176 + $0x24] sm:$0xf]
    %v187 = vld [vmem:[%s176 + $0x28] sm:$0xf]
    %v188 = vld [vmem:[%s176 + $0x2c] sm:$0xf]
    %v189 = vld [vmem:[%s176 + $0x30] sm:$0xf]
    %v190 = vld [vmem:[%s176 + $0x34] sm:$0xf]
    %v191 = vld [vmem:[%s176 + $0x38] sm:$0xf]
    %v192 = vld [vmem:[%s176 + $0x3c] sm:$0xf]
    %s193 = scalar_lea.vmem %s4, 1
    %v194 = vld [vmem:[%s193] sm:$0x1]
    %v196 = vperm.slane %v194, 0
    %v214 = vunpack.c.l.b16 %v177
    %v215 = vunpack.c.l.b16 %v178
    %v216 = vunpack.c.l.b16 %v179
    %v217 = vunpack.c.l.b16 %v180
    %v218 = vunpack.c.l.b16 %v181
    %v219 = vunpack.c.l.b16 %v182
    %v220 = vunpack.c.l.b16 %v183
    %v221 = vunpack.c.l.b16 %v184
    %v222 = vunpack.c.l.b16 %v185
    %v223 = vunpack.c.l.b16 %v186
    %v224 = vunpack.c.l.b16 %v187
    %v225 = vunpack.c.l.b16 %v188
    %v226 = vunpack.c.l.b16 %v189
    %v227 = vunpack.c.l.b16 %v190
    %v228 = vunpack.c.l.b16 %v191
    %v229 = vunpack.c.l.b16 %v192
    %v230 = vpack.c.b16 %v215, %v214
    %v231 = vpack.c.b16 %v217, %v216
    %v232 = vpack.c.b16 %v219, %v218
    %v233 = vpack.c.b16 %v221, %v220
    %v234 = vpack.c.b16 %v223, %v222
    %v235 = vpack.c.b16 %v225, %v224
    %v236 = vpack.c.b16 %v227, %v226
    %v237 = vpack.c.b16 %v229, %v228
    %246 = vmatpush.bf16.msra.mxu0 %v237
    %247 = vmatpush.bf16.msra.mxu0 %v236
    %248 = vmatpush.bf16.msra.mxu0 %v235
    %249 = vmatpush.bf16.msra.mxu0 %v234
    %250 = vmatpush.bf16.msra.mxu0 %v233
    %251 = vmatpush.bf16.msra.mxu0 %v232
    %252 = vmatpush.bf16.msra.mxu0 %v231
    %253 = vmatpush.bf16.msra.mxu0 %v230
    %254 = vmatmul.bf16.gmra.mxu0 %v175
    %v255 = vpop.f32.mrf.mxu0
    %v256 = vadd.f32 %v196, %v255
    %v257 = vpop.f32.mrf.mxu0
    %258 = vdwg.mxu0
    %v259 = vpack.c.bf16 %v256, %v256
    %v260 = vunpack.c.l.bf16 %v259
    %v261 = vtanh.pop %v260
    %v262 = vpack.c.bf16 %v261, %v261
    %v263 = vld [vmem:[#allocation4] sm:$0xf]
    %v264 = vld [vmem:[#allocation4 + $0x4] sm:$0xf]
    %v265 = vld [vmem:[#allocation4 + $0x8] sm:$0xf]
    %v266 = vld [vmem:[#allocation4 + $0xc] sm:$0xf]
    %v267 = vld [vmem:[#allocation4 + $0x10] sm:$0xf]
    %v268 = vld [vmem:[#allocation4 + $0x14] sm:$0xf]
    %v269 = vld [vmem:[#allocation4 + $0x18] sm:$0xf]
    %v270 = vld [vmem:[#allocation4 + $0x1c] sm:$0xf]
    %v271 = vld [vmem:[#allocation4 + $0x20] sm:$0xf]
    %v272 = vld [vmem:[#allocation4 + $0x24] sm:$0xf]
    %v273 = vld [vmem:[#allocation4 + $0x28] sm:$0xf]
    %v274 = vld [vmem:[#allocation4 + $0x2c] sm:$0xf]
    %v275 = vld [vmem:[#allocation4 + $0x30] sm:$0xf]
    %v276 = vld [vmem:[#allocation4 + $0x34] sm:$0xf]
    %v277 = vld [vmem:[#allocation4 + $0x38] sm:$0xf]
    %v278 = vld [vmem:[#allocation4 + $0x3c] sm:$0xf]
    %v279 = vld [vmem:[%s6] sm:$0x1]
    %v281 = vperm.slane %v279, 0
    %v299 = vunpack.c.l.b16 %v263
    %v300 = vunpack.c.l.b16 %v264
    %v301 = vunpack.c.l.b16 %v265
    %v302 = vunpack.c.l.b16 %v266
    %v303 = vunpack.c.l.b16 %v267
    %v304 = vunpack.c.l.b16 %v268
    %v305 = vunpack.c.l.b16 %v269
    %v306 = vunpack.c.l.b16 %v270
    %v307 = vunpack.c.l.b16 %v271
    %v308 = vunpack.c.l.b16 %v272
    %v309 = vunpack.c.l.b16 %v273
    %v310 = vunpack.c.l.b16 %v274
    %v311 = vunpack.c.l.b16 %v275
    %v312 = vunpack.c.l.b16 %v276
    %v313 = vunpack.c.l.b16 %v277
    %v314 = vunpack.c.l.b16 %v278
    %v315 = vpack.c.b16 %v300, %v299
    %v316 = vpack.c.b16 %v302, %v301
    %v317 = vpack.c.b16 %v304, %v303
    %v318 = vpack.c.b16 %v306, %v305
    %v319 = vpack.c.b16 %v308, %v307
    %v320 = vpack.c.b16 %v310, %v309
    %v321 = vpack.c.b16 %v312, %v311
    %v322 = vpack.c.b16 %v314, %v313
    %331 = vmatpush.bf16.msra.mxu0 %v322
    %332 = vmatpush.bf16.msra.mxu0 %v321
    %333 = vmatpush.bf16.msra.mxu0 %v320
    %334 = vmatpush.bf16.msra.mxu0 %v319
    %335 = vmatpush.bf16.msra.mxu0 %v318
    %336 = vmatpush.bf16.msra.mxu0 %v317
    %337 = vmatpush.bf16.msra.mxu0 %v316
    %338 = vmatpush.bf16.msra.mxu0 %v315
    %339 = vmatmul.bf16.gmra.mxu0 %v262
    %v340 = vpop.f32.mrf.mxu0
    %v341 = vadd.f32 %v281, %v340
    %v342 = vpop.f32.mrf.mxu0
    %343 = vdwg.mxu0
    %v344 = vpack.c.bf16 %v341, %v341
    %345 = vst [vmem:[%s7] sm:$0xf] %v344
    // Predicated region
    $region38: #{_forward_jit.1} parent=1 // pred_check
      _
    $region39: #{_forward_jit.1} parent=1 // pred_check_branch
      %347 = sbr.rel (0) target = $region41
    $region40: #{_forward_jit.1} parent=1 // pred_region
      _
    $region41: #{_forward_jit.1} parent=1 // pred_fallthru
      _
    // Predicated region
    $region42: #{_forward_jit.1} parent=1 // pred_check
      _
    $region43: #{_forward_jit.1} parent=1 // pred_check_branch
      %349 = sbr.rel (0) target = $region45
    $region44: #{_forward_jit.1} parent=1 // pred_region
      _
    $region45: #{_forward_jit.1} parent=1 // pred_fallthru
      _
    %350 = vsyncpa [#allocation3], 1
    %351 = vsyncpa [#allocation5], 1

</llo_original>
